<compile_context>
chip_gen: v7x
topology: tpu7x:2x2x1
jax: 0.10.0
libtpu: 0.0.40
codegen_flags: <defaults>
</compile_context>

<pallas_src>
import functools

import jax
import jax.numpy as jnp
from jax import lax
from jax.experimental import pallas as pl
from jax.experimental.pallas import tpu as pltpu

LANE = 128          # lane width
SUB = 8             # f32 sublane width (accumulator granularity)
TM_MAX = 8192       # max rows per DMA block  (8192*128*4B = 4 MiB per f32 input block)
CHUNK_ROWS = 1024   # rows per in-kernel compute chunk (bounds live VMEM temporaries)


def _sublane_multiple(*dtypes) -> int:
    """Minimum row multiple so (rows, 128) blocks tile cleanly for all dtypes."""
    m = SUB
    for dt in dtypes:
        itemsize = jnp.dtype(dt).itemsize
        m = max(m, SUB * max(1, 4 // max(1, itemsize)))   # 8 / 16 / 32
    return m


def _num_tensorcores() -> int:
    """Best-effort TensorCore count per chip (megacore split on 2-TC parts)."""
    try:
        info = pltpu.get_tpu_info()
        for name in ("num_cores", "core_count", "num_tensorcores",
                     "tensorcore_count", "num_cores_per_chip"):
            v = getattr(info, name, None)
            if isinstance(v, int) and 1 <= v <= 8:
                return v
    except Exception:
        pass
    try:
        kind = jax.devices()[0].device_kind.lower()
        if any(tag in kind for tag in ("lite", "v5e", "v6")):
            return 1          # v5e / v6e: single TensorCore per chip
    except Exception:
        pass
    return 2                  # 2-TC parts (e.g. v7x); harmless if wrong


def _vmem_limit_bytes(per_input_block_bytes: int) -> int:
    """Scoped-VMEM budget: 2 inputs x 2 pipeline buffers + chunk temps + slack."""
    need = 4 * per_input_block_bytes + (16 << 20)
    try:
        cap = int(getattr(pltpu.get_tpu_info(), "vmem_capacity_bytes", 0) or 0)
    except Exception:
        cap = 0
    if cap <= 0:
        cap = 64 << 20        # most conservative physical per-TC VMEM (v7x)
    return int(min(max(need, 32 << 20), cap - (4 << 20)))


def _focal_elementwise(x, t, *, alpha, gamma, logits):
    """Element-wise focal loss (matches the PyTorch reference semantics)."""
    x = x.astype(jnp.float32)
    t = t.astype(jnp.float32)
    if logits:
        # binary_cross_entropy_with_logits, reduction='none'
        bce = jnp.maximum(x, 0.0) - x * t + jnp.log1p(jnp.exp(-jnp.abs(x)))
    else:
        # binary_cross_entropy on probabilities; PyTorch clamps log at -100.
        log_p = jnp.maximum(jnp.log(x), -100.0)
        log_1mp = jnp.maximum(jnp.log(1.0 - x), -100.0)
        bce = -(t * log_p + (1.0 - t) * log_1mp)
    pt = jnp.exp(-bce)
    w = 1.0 - pt
    g = float(gamma)
    if g == int(g) and int(g) >= 0:
        gi = int(g)
        if gi == 0:
            wg = jnp.ones_like(w)
        else:
            wg = w
            for _ in range(gi - 1):   # gamma=2 -> single extra multiply (no pow)
                wg = wg * w
    else:
        wg = w ** g                   # non-integer gamma only (extra EUP work)
    return alpha * wg * bce


def _focal_loss_kernel(x_ref, t_ref, out_ref, *, alpha, gamma, logits,
                       rows, blocks_per_core, ragged, tm, chunk):
    c = pl.program_id(0)   # TensorCore axis ("parallel")
    j = pl.program_id(1)   # reduction axis ("arbitrary")

    @pl.when(j == 0)
    def _():
        out_ref[...] = jnp.zeros_like(out_ref)

    gblk = c * blocks_per_core + j
    n_chunks = tm // chunk

    def run(masked):
        def body(i, carry):
            off = i * chunk
            if not isinstance(off, int):
                off = pl.multiple_of(off, chunk)
            vals = _focal_elementwise(x_ref[pl.ds(off, chunk), :],
                                      t_ref[pl.ds(off, chunk), :],
                                      alpha=alpha, gamma=gamma, logits=logits)
            if masked:
                row = (lax.broadcasted_iota(jnp.int32, vals.shape, 0)
                       + gblk * tm + off)
                # where (select), not multiply: garbage overhang rows may hold
                # NaN/Inf from log() and must not propagate.
                vals = jnp.where(row < rows, vals, jnp.float32(0.0))
            # (chunk,128) -> (chunk//8, 8, 128) splits only the major dim, so
            # every (8,128) vreg tile stays intact (no relayout); sum(axis=0)
            # is a pure-VPU reduction into the resident (8,128) accumulator.
            out_ref[...] += jnp.sum(vals.reshape(-1, SUB, LANE), axis=0)
            return carry

        if n_chunks == 1:
            body(0, 0)
        else:
            lax.fori_loop(0, n_chunks, body, 0)

    if ragged:
        end_row = (gblk + 1) * tm

        @pl.when(end_row <= rows)
        def _():
            run(False)

        @pl.when(end_row > rows)
        def _():
            run(True)
    else:
        run(False)


def weighted_focal_loss(inputs, targets, *, alpha=0.25, gamma=2, logits=False):
    assert inputs.shape == targets.shape
    n = int(inputs.size)
    if n == 0:
        return jnp.float32(jnp.nan)   # torch mean of an empty tensor is NaN

    x_flat = inputs.reshape(-1)       # native dtype; free metadata reshape
    t_flat = targets.reshape(-1)

    rows = n // LANE
    sub_mult = _sublane_multiple(inputs.dtype, targets.dtype)
    if rows < sub_mult:
        # Too small for a tiled kernel; compute directly in plain JAX.
        return jnp.mean(_focal_elementwise(x_flat, t_flat, alpha=alpha,
                                           gamma=gamma, logits=logits))

    n_main = rows * LANE
    tm = min(TM_MAX, (rows // sub_mult) * sub_mult)   # dtype-aware multiple, <= rows
    if tm >= CHUNK_ROWS:
        tm = (tm // CHUNK_ROWS) * CHUNK_ROWS
        chunk = CHUNK_ROWS
    else:
        chunk = tm

    nblocks = pl.cdiv(rows, tm)
    ncores = max(1, min(_num_tensorcores(), nblocks))
    bpc = pl.cdiv(nblocks, ncores)                    # row-blocks per core
    ragged = (ncores * bpc * tm != rows)              # any block overhangs?

    # When n % 128 == 0 these are free bitcasts; otherwise XLA copies the sliced
    # prefix once before the custom call (perf-only; tail handled below).
    x2 = x_flat[:n_main].reshape(rows, LANE)
    t2 = t_flat[:n_main].reshape(rows, LANE)

    def in_index_map(c, j):
        blk = c * bpc + j
        # Clamp so fully out-of-range blocks re-read a valid block; their
        # contribution is masked to zero in-kernel.
        return (jnp.minimum(blk, nblocks - 1), 0)

    in_spec = pl.BlockSpec((tm, LANE), in_index_map)

    kernel = functools.partial(
        _focal_loss_kernel,
        alpha=float(alpha), gamma=gamma, logits=bool(logits),
        rows=rows, blocks_per_core=bpc, ragged=ragged, tm=tm, chunk=chunk)

    per_input_block_bytes = tm * LANE * max(jnp.dtype(inputs.dtype).itemsize,
                                            jnp.dtype(targets.dtype).itemsize)
    bytes_accessed = (n_main * (jnp.dtype(inputs.dtype).itemsize
                                + jnp.dtype(targets.dtype).itemsize)
                      + ncores * SUB * LANE * 4)

    partials = pl.pallas_call(
        kernel,
        out_shape=jax.ShapeDtypeStruct((ncores, SUB, LANE), jnp.float32),
        grid=(ncores, bpc),
        in_specs=[in_spec, in_spec],
        out_specs=pl.BlockSpec((None, SUB, LANE), lambda c, j: (c, 0, 0)),
        compiler_params=pltpu.CompilerParams(
            dimension_semantics=("parallel", "arbitrary"),
            vmem_limit_bytes=_vmem_limit_bytes(per_input_block_bytes)),
        cost_estimate=pl.CostEstimate(
            flops=15 * n_main,
            transcendentals=3 * n_main,
            bytes_accessed=int(bytes_accessed)),
    )(x2, t2)

    total = jnp.sum(partials)

    if n_main < n:
        # <128-element lane remainder handled in plain JAX (no pad-copy of it).
        total = total + jnp.sum(_focal_elementwise(
            x_flat[n_main:], t_flat[n_main:],
            alpha=alpha, gamma=gamma, logits=logits))

    return total / jnp.float32(n)


def weighted_focal_loss_ref(inputs, targets, *, alpha=0.25, gamma=2,
                            logits=False):
    x = inputs.astype(jnp.float32)
    t = targets.astype(jnp.float32)
    if logits:
        bce = jnp.maximum(x, 0.0) - x * t + jnp.log1p(jnp.exp(-jnp.abs(x)))
    else:
        log_p = jnp.maximum(jnp.log(x), -100.0)
        log_1mp = jnp.maximum(jnp.log(1.0 - x), -100.0)
        bce = -(t * log_p + (1.0 - t) * log_1mp)
    pt = jnp.exp(-bce)
    return jnp.mean(alpha * (1.0 - pt) ** gamma * bce)


if __name__ == "__main__":
    key = jax.random.PRNGKey(0)
    k1, k2, k3, k4 = jax.random.split(key, 4)

    # NCHW-shaped inputs, consistent with a segmentation-style use of the loss.
    B, C, H, W = 2, 4, 16, 16
    # logits=False -> inputs are probabilities in (0, 1)
    inputs = jax.nn.sigmoid(jax.random.normal(k1, (B, C, H, W), jnp.float32))
    targets = jax.random.bernoulli(k2, 0.3, (B, C, H, W)).astype(jnp.float32)

    loss = weighted_focal_loss(inputs, targets, alpha=0.25, gamma=2,
                               logits=False)
    loss = jax.block_until_ready(loss)
    ref = weighted_focal_loss_ref(inputs, targets, alpha=0.25, gamma=2,
                                  logits=False)
    assert jnp.allclose(loss, ref, rtol=1e-5, atol=1e-6), (loss, ref)

    # Secondary check: element count not a multiple of 128 (exercises the
    # in-kernel ragged mask, the multi-block grid and the plain-JAX tail).
    shp2 = (2, 3, 19, 23)
    inputs2 = jax.nn.sigmoid(jax.random.normal(k3, shp2, jnp.float32))
    targets2 = jax.random.bernoulli(k4, 0.3, shp2).astype(jnp.float32)
    loss2 = jax.block_until_ready(
        weighted_focal_loss(inputs2, targets2, alpha=0.25, gamma=2,
                            logits=False))
    ref2 = weighted_focal_loss_ref(inputs2, targets2, alpha=0.25, gamma=2,
                                   logits=False)
    assert jnp.allclose(loss2, ref2, rtol=1e-5, atol=1e-6), (loss2, ref2)

    print("KERNEL_OK")
</pallas_src>

<mosaic_0001>
module attributes {stable_mosaic.version = 11 : i64} {
  func.func @_focal_loss_kernel(%arg0: i32, %arg1: i32, %arg2: memref<16x128xf32, #tpu.memory_space<vmem>>, %arg3: memref<16x128xf32, #tpu.memory_space<vmem>>, %arg4: memref<1x8x128xf32, #tpu.memory_space<vmem>>) attributes {dimension_semantics = [#tpu.dimension_semantics<parallel>, #tpu.dimension_semantics<arbitrary>], iteration_bounds = array<i64: 1, 1>, scalar_prefetch = 0 : i64, scratch_operands = 0 : i64, tpu.core_type = #tpu.core_type<tc>, window_params = [{transform_indices = @transform_0, window_bounds = array<i64: 16, 128>}, {transform_indices = @transform_1, window_bounds = array<i64: 16, 128>}, {transform_indices = @transform_2, window_bounds = array<i64: 1, 8, 128>}]} {
    %c0_i32 = arith.constant 0 : i32
    %0 = arith.cmpi eq, %arg1, %c0_i32 : i32
    %1 = arith.extui %0 : i1 to i32
    %c0_i32_0 = arith.constant 0 : i32
    %2 = arith.cmpi ne, %1, %c0_i32_0 : i32
    scf.if %2 {
      %cst_18 = arith.constant 0.000000e+00 : f32
      %37 = vector.broadcast %cst_18 : f32 to vector<8x128xf32>
      %c0_19 = arith.constant 0 : index
      %c0_20 = arith.constant 0 : index
      %c0_21 = arith.constant 0 : index
      %38 = vector.load %arg4[%c0_19, %c0_20, %c0_21] : memref<1x8x128xf32, #tpu.memory_space<vmem>>, vector<1x8x128xf32>
      %39 = vector.shape_cast %38 : vector<1x8x128xf32> to vector<8x128xf32>
      %40 = vector.shape_cast %37 : vector<8x128xf32> to vector<1x8x128xf32>
      tpu.vector_store %arg4[%c0_19, %c0_20, %c0_21], %40 {strides = array<i32>} : memref<1x8x128xf32, #tpu.memory_space<vmem>>, vector<1x8x128xf32>,
    } else {
    }
    %c0 = arith.constant 0 : index
    %c0_1 = arith.constant 0 : index
    %3 = vector.load %arg2[%c0, %c0_1] : memref<16x128xf32, #tpu.memory_space<vmem>>, vector<16x128xf32>
    %c0_2 = arith.constant 0 : index
    %c0_3 = arith.constant 0 : index
    %4 = vector.load %arg3[%c0_2, %c0_3] : memref<16x128xf32, #tpu.memory_space<vmem>>, vector<16x128xf32>
    %5 = math.log %3 : vector<16x128xf32>
    %cst = arith.constant -1.000000e+02 : f32
    %6 = vector.broadcast %cst : f32 to vector<16x128xf32>
    %7 = arith.maximumf %5, %6 : vector<16x128xf32>
    %cst_4 = arith.constant 1.000000e+00 : f32
    %8 = vector.broadcast %cst_4 : f32 to vector<16x128xf32>
    %9 = arith.subf %8, %3 : vector<16x128xf32>
    %10 = math.log %9 : vector<16x128xf32>
    %cst_5 = arith.constant -1.000000e+02 : f32
    %11 = vector.broadcast %cst_5 : f32 to vector<16x128xf32>
    %12 = arith.maximumf %10, %11 : vector<16x128xf32>
    %13 = arith.mulf %4, %7 : vector<16x128xf32>
    %cst_6 = arith.constant 1.000000e+00 : f32
    %14 = vector.broadcast %cst_6 : f32 to vector<16x128xf32>
    %15 = arith.subf %14, %4 : vector<16x128xf32>
    %16 = arith.mulf %15, %12 : vector<16x128xf32>
    %17 = arith.addf %13, %16 : vector<16x128xf32>
    %cst_7 = arith.constant 0.000000e+00 : f32
    %18 = vector.broadcast %cst_7 : f32 to vector<16x128xf32>
    %19 = arith.subf %18, %17 : vector<16x128xf32>
    %cst_8 = arith.constant 0.000000e+00 : f32
    %20 = vector.broadcast %cst_8 : f32 to vector<16x128xf32>
    %21 = arith.subf %20, %19 : vector<16x128xf32>
    %22 = math.exp %21 : vector<16x128xf32>
    %cst_9 = arith.constant 1.000000e+00 : f32
    %23 = vector.broadcast %cst_9 : f32 to vector<16x128xf32>
    %24 = arith.subf %23, %22 : vector<16x128xf32>
    %25 = arith.mulf %24, %24 : vector<16x128xf32>
    %cst_10 = arith.constant 2.500000e-01 : f32
    %26 = vector.broadcast %cst_10 : f32 to vector<16x128xf32>
    %27 = arith.mulf %26, %25 : vector<16x128xf32>
    %28 = arith.mulf %27, %19 : vector<16x128xf32>
    %c0_11 = arith.constant 0 : index
    %c0_12 = arith.constant 0 : index
    %c0_13 = arith.constant 0 : index
    %29 = vector.load %arg4[%c0_11, %c0_12, %c0_13] : memref<1x8x128xf32, #tpu.memory_space<vmem>>, vector<1x8x128xf32>
    %30 = vector.shape_cast %29 : vector<1x8x128xf32> to vector<8x128xf32>
    %31 = vector.shape_cast %28 : vector<16x128xf32> to vector<2x8x128xf32>
    %cst_14 = arith.constant dense<0.000000e+00> : vector<8x128xf32>
    %32 = vector.multi_reduction <add>, %31, %cst_14 [0] : vector<2x8x128xf32> to vector<8x128xf32>
    %33 = arith.addf %30, %32 : vector<8x128xf32>
    %c0_15 = arith.constant 0 : index
    %c0_16 = arith.constant 0 : index
    %c0_17 = arith.constant 0 : index
    %34 = vector.load %arg4[%c0_15, %c0_16, %c0_17] : memref<1x8x128xf32, #tpu.memory_space<vmem>>, vector<1x8x128xf32>
    %35 = vector.shape_cast %34 : vector<1x8x128xf32> to vector<8x128xf32>
    %36 = vector.shape_cast %33 : vector<8x128xf32> to vector<1x8x128xf32>
    tpu.vector_store %arg4[%c0_15, %c0_16, %c0_17], %36 {strides = array<i32>} : memref<1x8x128xf32, #tpu.memory_space<vmem>>, vector<1x8x128xf32>,
    return
  }
  func.func @transform_0(%arg0: i32, %arg1: i32) -> (i32, i32) {
    %c1_i32 = arith.constant 1 : i32
    %0 = arith.muli %arg0, %c1_i32 : i32
    %1 = arith.addi %0, %arg1 : i32
    %c0_i32 = arith.constant 0 : i32
    %2 = arith.minsi %1, %c0_i32 : i32
    %c0_i32_0 = arith.constant 0 : i32
    %c0_i32_1 = arith.constant 0 : i32
    return %2, %c0_i32_0 : i32, i32
  }
  func.func @transform_1(%arg0: i32, %arg1: i32) -> (i32, i32) {
    %c1_i32 = arith.constant 1 : i32
    %0 = arith.muli %arg0, %c1_i32 : i32
    %1 = arith.addi %0, %arg1 : i32
    %c0_i32 = arith.constant 0 : i32
    %2 = arith.minsi %1, %c0_i32 : i32
    %c0_i32_0 = arith.constant 0 : i32
    %c0_i32_1 = arith.constant 0 : i32
    return %2, %c0_i32_0 : i32, i32
  }
  func.func @transform_2(%arg0: i32, %arg1: i32) -> (i32, i32, i32) {
    %c0_i32 = arith.constant 0 : i32
    %c0_i32_0 = arith.constant 0 : i32
    %c0_i32_1 = arith.constant 0 : i32
    return %arg0, %c0_i32, %c0_i32_0 : i32, i32, i32
  }
}

</mosaic_0001>

<llo_original>
// kernel: tpu_custom_call.1
$region0: #{tpu_custom_call.1}
  #allocation0 [shape = 'u32[]', space=smem, size = 0x4, offset = 0x4, fixed_abs, tag = 'smem constant byte address 0x4 - core index']
  #allocation1 [shape = 'u32[144,128]{1,0:T(1,128)}', space=vmem, size = 0x12000, scoped, tag = 'internal scratch']
  %s0 = inlined_call_operand.hbm [shape: f32[16,128], index: 0, kind: input, shape index: {}]
  %s1 = inlined_call_operand.hbm [shape: f32[16,128], index: 1, kind: input, shape index: {}]
  %s2 = inlined_call_operand.hbm [shape: f32[1,8,128], index: 2, kind: output, shape index: {}]
  %s3 = sld [smem:[#allocation0]]
  $region30: #{tpu_custom_call.1} parent=0
    _
  %s5 = ssub.s32 1, %s3
  %s6 = scalar_select 0, %s5, %s3
  $region1: #{tpu_custom_call.1} parent=0
    #allocation2 [shape = 'u8[8192]{0}', space=vmem, size = 0x2000, scoped, tag = 'input window, operand 0, single buffered']
    #allocation3 [shape = 's32[1]{0}', space=sflag, size = 0x4, scoped, tag = 'scoped memory for tpu_custom_call.1']
    #allocation4 [shape = 's32[1]{0}', space=sflag, size = 0x4, scoped, tag = 'scoped memory for tpu_custom_call.1']
    #allocation5 [shape = 'u8[8192]{0}', space=vmem, size = 0x2000, scoped, tag = 'input window, operand 1, single buffered']
    #allocation6 [shape = 's32[1]{0}', space=sflag, size = 0x4, scoped, tag = 'scoped memory for tpu_custom_call.1']
    #allocation7 [shape = 'u8[4096]{0}', space=vmem, size = 0x1000, scoped, tag = 'output window, operand 0, single buffered']
    %7 = vsyncpa [#allocation3], 0
    %8 = vsyncpa [#allocation6], 0
    %9 = vsyncpa [#allocation4], 0
    // Predicated region
    $region2: #{tpu_custom_call.1} parent=1 // pred_check
      _
    $region3: #{tpu_custom_call.1} parent=1 // pred_check_branch
      %11 = sbr.rel (0) target = $region5
    $region4: #{tpu_custom_call.1} parent=1 // pred_region
      %s12 = sadd.s32 0, 0
      %p13 = scmp.lt.s32.totalorder %s12, 0
      %s14 = scalar_select %p13, %s12, 0
      %s15 = smul.u32 2, %s14
      %s17 = ssub.s32 256, 256
      %18 = vsyncadd [#allocation3], %s17
      %s19 = smul.addr %s15, 128
      %s20 = scalar_lea.hbm %s0, %s19
      %s21 = sshll.u32 [#allocation2], 4
      %s22 = int_to_ptr.vmem [resolvable:$true] %s21
      %27 = dma.hbm_to_vmem [thread:$0]  %s20, 256, %s22, [#allocation3], 128, 128, 8
    $region5: #{tpu_custom_call.1} parent=1 // pred_fallthru
      _
    // Predicated region
    $region6: #{tpu_custom_call.1} parent=1 // pred_check
      _
    $region7: #{tpu_custom_call.1} parent=1 // pred_check_branch
      %29 = sbr.rel (0) target = $region9
    $region8: #{tpu_custom_call.1} parent=1 // pred_region
      %s30 = sadd.s32 0, 0
      %p31 = scmp.lt.s32.totalorder %s30, 0
      %s32 = scalar_select %p31, %s30, 0
      %s33 = smul.u32 2, %s32
      %s35 = ssub.s32 256, 256
      %36 = vsyncadd [#allocation6], %s35
      %s37 = smul.addr %s33, 128
      %s38 = scalar_lea.hbm %s1, %s37
      %s39 = sshll.u32 [#allocation5], 4
      %s40 = int_to_ptr.vmem [resolvable:$true] %s39
      %45 = dma.hbm_to_vmem [thread:$0]  %s38, 256, %s40, [#allocation6], 128, 128, 8
    $region9: #{tpu_custom_call.1} parent=1 // pred_fallthru
      _
    // Predicated region
    $region10: #{tpu_custom_call.1} parent=1 // pred_check
      _
    $region11: #{tpu_custom_call.1} parent=1 // pred_check_branch
      %47 = sbr.rel (0) target = $region13
    $region12: #{tpu_custom_call.1} parent=1 // pred_region
      %48 = dma.done [#allocation3], 256
    $region13: #{tpu_custom_call.1} parent=1 // pred_fallthru
      _
    // Predicated region
    $region14: #{tpu_custom_call.1} parent=1 // pred_check
      _
    $region15: #{tpu_custom_call.1} parent=1 // pred_check_branch
      %50 = sbr.rel (0) target = $region17
    $region16: #{tpu_custom_call.1} parent=1 // pred_region
      %51 = dma.done [#allocation6], 256
    $region17: #{tpu_custom_call.1} parent=1 // pred_fallthru
      _
    %s52 = sadd.s32 0, 0
    %p53 = scmp.lt.s32.totalorder %s52, 0
    %s54 = scalar_select %p53, %s52, 0
    %s55 = smul.u32 2, %s54
    %s56 = sadd.s32 0, 0
    %p57 = scmp.lt.s32.totalorder %s56, 0
    %s58 = scalar_select %p57, %s56, 0
    %s59 = smul.u32 2, %s58
    %p60 = scmp.eq.s32.totalorder 0, 0
    // Predicated region
    $region18: #{tpu_custom_call.1} parent=1 // pred_check
      %p61 = pneg %p60
    $region19: #{tpu_custom_call.1} parent=1 // pred_check_branch
      %63 = sbr.rel (%p61) target = $region21
    $region20: #{tpu_custom_call.1} parent=1 // pred_region
      %64 = vst [vmem:[#allocation7] sm:$0xff] 0.0
    $region21: #{tpu_custom_call.1} parent=1 // pred_fallthru
      _
    %v65 = vld [vmem:[#allocation2] sm:$0xff]
    %v66 = vld [vmem:[#allocation2 + $0x8] sm:$0xff]
    %v67 = vld [vmem:[#allocation5] sm:$0xff]
    %v68 = vld [vmem:[#allocation5 + $0x8] sm:$0xff]
    %v69 = vlog2.pop %v65
    %v70 = vmul.f32 %v69, 0.6931472
    %v71 = vlog2.pop %v66
    %v72 = vmul.f32 %v71, 0.6931472
    %v73 = vmax.f32 %v70, -100.0
    %v74 = vmax.f32 %v72, -100.0
    %v75 = vsub.f32 1.0, %v65
    %v76 = vsub.f32 1.0, %v66
    %v77 = vlog2.pop %v75
    %v78 = vmul.f32 %v77, 0.6931472
    %v79 = vlog2.pop %v76
    %v80 = vmul.f32 %v79, 0.6931472
    %v81 = vmax.f32 %v78, -100.0
    %v82 = vmax.f32 %v80, -100.0
    %v83 = vmul.f32 %v67, %v73
    %v84 = vmul.f32 %v68, %v74
    %v85 = vsub.f32 1.0, %v67
    %v86 = vsub.f32 1.0, %v68
    %v87 = vmul.f32 %v85, %v81
    %v88 = vmul.f32 %v86, %v82
    %v89 = vadd.f32 %v83, %v87
    %v90 = vadd.f32 %v84, %v88
    %v91 = vsub.f32 0.0, %v89
    %v92 = vsub.f32 0.0, %v90
    %v93 = vsub.f32 0.0, %v91
    %v94 = vsub.f32 0.0, %v92
    %v95 = vmul.f32 %v93, 1.442695
    %v96 = vpow.pop %v95
    %v97 = vmul.f32 %v94, 1.442695
    %v98 = vpow.pop %v97
    %v99 = vsub.f32 1.0, %v96
    %v100 = vsub.f32 1.0, %v98
    %v101 = vmul.f32 %v99, %v99
    %v102 = vmul.f32 %v100, %v100
    %v103 = vmul.f32 %v101, 0.25
    %v104 = vmul.f32 %v102, 0.25
    %v105 = vmul.f32 %v103, %v91
    %v106 = vmul.f32 %v104, %v92
    %v107 = vld [vmem:[#allocation7] sm:$0xff]
    %v108 = vadd.f32 %v105, %v106
    %v109 = vadd.f32 %v107, %v108
    %110 = vst [vmem:[#allocation7] sm:$0xff] %v109
    // Predicated region
    $region22: #{tpu_custom_call.1} parent=1 // pred_check
      _
    $region23: #{tpu_custom_call.1} parent=1 // pred_check_branch
      %112 = sbr.rel (0) target = $region25
    $region24: #{tpu_custom_call.1} parent=1 // pred_region
      %s114 = ssub.s32 128, 128
      %115 = vsyncadd [#allocation4], %s114
      %s117 = sshll.u32 [#allocation7], 4
      %s118 = int_to_ptr.vmem [resolvable:$true] %s117
      %120 = dma.vmem_to_hbm [thread:$0]  %s118, 128, %s2, [#allocation4]
    $region25: #{tpu_custom_call.1} parent=1 // pred_fallthru
      _
    // Predicated region
    $region26: #{tpu_custom_call.1} parent=1 // pred_check
      _
    $region27: #{tpu_custom_call.1} parent=1 // pred_check_branch
      %122 = sbr.rel (0) target = $region29
    $region28: #{tpu_custom_call.1} parent=1 // pred_region
      %123 = dma.done [#allocation4], 128
    $region29: #{tpu_custom_call.1} parent=1 // pred_fallthru
      _
    %124 = vsyncpa [#allocation3], 1
    %125 = vsyncpa [#allocation6], 1
    %126 = vsyncpa [#allocation4], 1

</llo_original>
